<compile_context>
chip_gen: v7x
topology: tpu7x:2x2x1
jax: 0.10.0
libtpu: 0.0.40
codegen_flags: <defaults>
</compile_context>

<pallas_src>
import jax
import jax.numpy as jnp
from jax import lax
from jax.experimental import pallas as pl
from jax.experimental.pallas import tpu as pltpu

# Contract lhs dim 1 with rhs dim 1, i.e. lhs @ rhs.T without materializing a
# transpose (the MXU consumes the transposed operand directly).
_DN_TRANS_B = (((1,), (1,)), ((), ()))


def _rnn_kernel(x_ref, w_in_ref, w_state_ref, w_out_ref, b_in_ref, b_out_ref,
                p_ref):
    b, seq = x_ref.shape           # static
    f = w_state_ref.shape[0]       # static

    x = x_ref[...]                 # (b, seq)
    w_in = w_in_ref[...]           # (f, 1)
    w_state = w_state_ref[...]     # (f, f)
    b_in = b_in_ref[...]           # (f, 1)

    # ---- Loop-invariant input projections, kept entirely in vregs ----------
    # bias_bf = ones(b,1) @ b_in.T            -> (b, f)
    # pre[t]  = x[:, t:t+1] @ w_in.T + bias   -> (b, f)   (D == 1 outer product)
    bias_bf = lax.dot_general(jnp.ones((b, 1), jnp.float32), b_in, _DN_TRANS_B,
                              preferred_element_type=jnp.float32)
    pre = [lax.dot_general(x[:, t:t + 1], w_in, _DN_TRANS_B,
                           preferred_element_type=jnp.float32) + bias_bf
           for t in range(seq)]

    # ---- Serial recurrence: only matmul + add + tanh on the chain ----------
    # h is lane-dense (b, f); step 0 folds away the matmul with h == 0.
    h = jnp.tanh(pre[0])
    for t in range(1, seq):
        rec = lax.dot_general(h, w_state, _DN_TRANS_B,          # h @ w_state.T
                              preferred_element_type=jnp.float32)
        h = jnp.tanh(rec + pre[t])

    # ---- Epilogue: p = h @ w_out + b_out (no transpose in (b, f) layout) ---
    p_ref[...] = (jnp.dot(h, w_out_ref[...], preferred_element_type=jnp.float32)
                  + b_out_ref[...])


def vanilla_rnn_forward(x, w_in, w_state, w_out, b_in, b_out):
    """x: (batch, seq) float32. Returns p: (batch, num_classes) float32."""
    b, seq = x.shape
    f, d = w_in.shape
    c = w_out.shape[1]
    assert d == 1, "reference module only type-checks for input_dim == 1"
    assert seq >= 1

    vmem = pl.BlockSpec(memory_space=pltpu.MemorySpace.VMEM)
    return pl.pallas_call(
        _rnn_kernel,
        out_shape=jax.ShapeDtypeStruct((b, c), jnp.float32),
        in_specs=[vmem] * 6,
        out_specs=vmem,
    )(x, w_in, w_state, w_out, b_in, b_out)


def _reference_forward(x, w_in, w_state, w_out, b_in, b_out):
    """Pure-JAX reference mirroring the PyTorch loop."""
    b, l = x.shape
    f = w_in.shape[0]
    h = jnp.zeros((f, b), jnp.float32)
    for t in range(l):
        lin = w_in @ x[:, t].reshape(1, -1) + w_state @ h + b_in
        h = jnp.tanh(lin)
    return h.T @ w_out + b_out


if __name__ == "__main__":
    # Module hyperparameters (input_dim must be 1, see note above).
    seq_length, input_dim, num_hidden, num_classes, batch_size = 8, 1, 32, 10, 8

    key = jax.random.PRNGKey(0)
    k_x, k_win, k_wst, k_wout, k_bin, k_bout = jax.random.split(key, 6)

    x = jax.random.normal(k_x, (batch_size, seq_length), jnp.float32)
    w_in = jax.random.normal(k_win, (num_hidden, input_dim), jnp.float32)
    w_state = jax.random.normal(k_wst, (num_hidden, num_hidden), jnp.float32)
    w_out = jax.random.normal(k_wout, (num_hidden, num_classes), jnp.float32)
    b_in = jax.random.normal(k_bin, (num_hidden, 1), jnp.float32)
    b_out = jax.random.normal(k_bout, (1, num_classes), jnp.float32)

    p = vanilla_rnn_forward(x, w_in, w_state, w_out, b_in, b_out)
    p = jax.block_until_ready(p)

    p_ref = _reference_forward(x, w_in, w_state, w_out, b_in, b_out)
    assert p.shape == (batch_size, num_classes)
    assert jnp.allclose(p, p_ref, atol=1e-3, rtol=1e-3), "mismatch vs reference"

    print("KERNEL_OK")
</pallas_src>

<mosaic_0001>
module attributes {stable_mosaic.version = 11 : i64} {
  func.func @_rnn_kernel(%arg0: memref<8x8xf32, #tpu.memory_space<vmem>>, %arg1: memref<32x1xf32, #tpu.memory_space<vmem>>, %arg2: memref<32x32xf32, #tpu.memory_space<vmem>>, %arg3: memref<32x10xf32, #tpu.memory_space<vmem>>, %arg4: memref<32x1xf32, #tpu.memory_space<vmem>>, %arg5: memref<1x10xf32, #tpu.memory_space<vmem>>, %arg6: memref<8x10xf32, #tpu.memory_space<vmem>>) attributes {dimension_semantics = [], scalar_prefetch = 0 : i64, scratch_operands = 0 : i64, tpu.core_type = #tpu.core_type<tc>} {
    %c0 = arith.constant 0 : index
    %c0_0 = arith.constant 0 : index
    %0 = vector.load %arg0[%c0, %c0_0] : memref<8x8xf32, #tpu.memory_space<vmem>>, vector<8x8xf32>
    %c0_1 = arith.constant 0 : index
    %c0_2 = arith.constant 0 : index
    %1 = vector.load %arg1[%c0_1, %c0_2] : memref<32x1xf32, #tpu.memory_space<vmem>>, vector<32x1xf32>
    %c0_3 = arith.constant 0 : index
    %c0_4 = arith.constant 0 : index
    %2 = vector.load %arg2[%c0_3, %c0_4] : memref<32x32xf32, #tpu.memory_space<vmem>>, vector<32x32xf32>
    %c0_5 = arith.constant 0 : index
    %c0_6 = arith.constant 0 : index
    %3 = vector.load %arg4[%c0_5, %c0_6] : memref<32x1xf32, #tpu.memory_space<vmem>>, vector<32x1xf32>
    %cst = arith.constant 1.000000e+00 : f32
    %4 = vector.broadcast %cst : f32 to vector<8x1xf32>
    %cst_7 = arith.constant dense<0.000000e+00> : vector<8x32xf32>
    %5 = tpu.matmul %4, %3, %cst_7 {dimension_numbers = #tpu.dot_dimension_numbers<[1], [1], [0], [0], [0, 0, 1, 0], [], []>} : vector<8x1xf32>, vector<32x1xf32>, vector<8x32xf32> -> vector<8x32xf32>
    %6 = vector.extract_strided_slice %0 {offsets = [0, 0], sizes = [8, 1], strides = [1, 1]} : vector<8x8xf32> to vector<8x1xf32>
    %cst_8 = arith.constant dense<0.000000e+00> : vector<8x32xf32>
    %7 = tpu.matmul %6, %1, %cst_8 {dimension_numbers = #tpu.dot_dimension_numbers<[1], [1], [0], [0], [0, 0, 1, 0], [], []>} : vector<8x1xf32>, vector<32x1xf32>, vector<8x32xf32> -> vector<8x32xf32>
    %8 = arith.addf %7, %5 : vector<8x32xf32>
    %9 = vector.extract_strided_slice %0 {offsets = [0, 1], sizes = [8, 1], strides = [1, 1]} : vector<8x8xf32> to vector<8x1xf32>
    %cst_9 = arith.constant dense<0.000000e+00> : vector<8x32xf32>
    %10 = tpu.matmul %9, %1, %cst_9 {dimension_numbers = #tpu.dot_dimension_numbers<[1], [1], [0], [0], [0, 0, 1, 0], [], []>} : vector<8x1xf32>, vector<32x1xf32>, vector<8x32xf32> -> vector<8x32xf32>
    %11 = arith.addf %10, %5 : vector<8x32xf32>
    %12 = vector.extract_strided_slice %0 {offsets = [0, 2], sizes = [8, 1], strides = [1, 1]} : vector<8x8xf32> to vector<8x1xf32>
    %cst_10 = arith.constant dense<0.000000e+00> : vector<8x32xf32>
    %13 = tpu.matmul %12, %1, %cst_10 {dimension_numbers = #tpu.dot_dimension_numbers<[1], [1], [0], [0], [0, 0, 1, 0], [], []>} : vector<8x1xf32>, vector<32x1xf32>, vector<8x32xf32> -> vector<8x32xf32>
    %14 = arith.addf %13, %5 : vector<8x32xf32>
    %15 = vector.extract_strided_slice %0 {offsets = [0, 3], sizes = [8, 1], strides = [1, 1]} : vector<8x8xf32> to vector<8x1xf32>
    %cst_11 = arith.constant dense<0.000000e+00> : vector<8x32xf32>
    %16 = tpu.matmul %15, %1, %cst_11 {dimension_numbers = #tpu.dot_dimension_numbers<[1], [1], [0], [0], [0, 0, 1, 0], [], []>} : vector<8x1xf32>, vector<32x1xf32>, vector<8x32xf32> -> vector<8x32xf32>
    %17 = arith.addf %16, %5 : vector<8x32xf32>
    %18 = vector.extract_strided_slice %0 {offsets = [0, 4], sizes = [8, 1], strides = [1, 1]} : vector<8x8xf32> to vector<8x1xf32>
    %cst_12 = arith.constant dense<0.000000e+00> : vector<8x32xf32>
    %19 = tpu.matmul %18, %1, %cst_12 {dimension_numbers = #tpu.dot_dimension_numbers<[1], [1], [0], [0], [0, 0, 1, 0], [], []>} : vector<8x1xf32>, vector<32x1xf32>, vector<8x32xf32> -> vector<8x32xf32>
    %20 = arith.addf %19, %5 : vector<8x32xf32>
    %21 = vector.extract_strided_slice %0 {offsets = [0, 5], sizes = [8, 1], strides = [1, 1]} : vector<8x8xf32> to vector<8x1xf32>
    %cst_13 = arith.constant dense<0.000000e+00> : vector<8x32xf32>
    %22 = tpu.matmul %21, %1, %cst_13 {dimension_numbers = #tpu.dot_dimension_numbers<[1], [1], [0], [0], [0, 0, 1, 0], [], []>} : vector<8x1xf32>, vector<32x1xf32>, vector<8x32xf32> -> vector<8x32xf32>
    %23 = arith.addf %22, %5 : vector<8x32xf32>
    %24 = vector.extract_strided_slice %0 {offsets = [0, 6], sizes = [8, 1], strides = [1, 1]} : vector<8x8xf32> to vector<8x1xf32>
    %cst_14 = arith.constant dense<0.000000e+00> : vector<8x32xf32>
    %25 = tpu.matmul %24, %1, %cst_14 {dimension_numbers = #tpu.dot_dimension_numbers<[1], [1], [0], [0], [0, 0, 1, 0], [], []>} : vector<8x1xf32>, vector<32x1xf32>, vector<8x32xf32> -> vector<8x32xf32>
    %26 = arith.addf %25, %5 : vector<8x32xf32>
    %27 = vector.extract_strided_slice %0 {offsets = [0, 7], sizes = [8, 1], strides = [1, 1]} : vector<8x8xf32> to vector<8x1xf32>
    %cst_15 = arith.constant dense<0.000000e+00> : vector<8x32xf32>
    %28 = tpu.matmul %27, %1, %cst_15 {dimension_numbers = #tpu.dot_dimension_numbers<[1], [1], [0], [0], [0, 0, 1, 0], [], []>} : vector<8x1xf32>, vector<32x1xf32>, vector<8x32xf32> -> vector<8x32xf32>
    %29 = arith.addf %28, %5 : vector<8x32xf32>
    %30 = math.tanh %8 : vector<8x32xf32>
    %cst_16 = arith.constant dense<0.000000e+00> : vector<8x32xf32>
    %31 = tpu.matmul %30, %2, %cst_16 {dimension_numbers = #tpu.dot_dimension_numbers<[1], [1], [0], [0], [0, 0, 1, 0], [], []>} : vector<8x32xf32>, vector<32x32xf32>, vector<8x32xf32> -> vector<8x32xf32>
    %32 = arith.addf %31, %11 : vector<8x32xf32>
    %33 = math.tanh %32 : vector<8x32xf32>
    %cst_17 = arith.constant dense<0.000000e+00> : vector<8x32xf32>
    %34 = tpu.matmul %33, %2, %cst_17 {dimension_numbers = #tpu.dot_dimension_numbers<[1], [1], [0], [0], [0, 0, 1, 0], [], []>} : vector<8x32xf32>, vector<32x32xf32>, vector<8x32xf32> -> vector<8x32xf32>
    %35 = arith.addf %34, %14 : vector<8x32xf32>
    %36 = math.tanh %35 : vector<8x32xf32>
    %cst_18 = arith.constant dense<0.000000e+00> : vector<8x32xf32>
    %37 = tpu.matmul %36, %2, %cst_18 {dimension_numbers = #tpu.dot_dimension_numbers<[1], [1], [0], [0], [0, 0, 1, 0], [], []>} : vector<8x32xf32>, vector<32x32xf32>, vector<8x32xf32> -> vector<8x32xf32>
    %38 = arith.addf %37, %17 : vector<8x32xf32>
    %39 = math.tanh %38 : vector<8x32xf32>
    %cst_19 = arith.constant dense<0.000000e+00> : vector<8x32xf32>
    %40 = tpu.matmul %39, %2, %cst_19 {dimension_numbers = #tpu.dot_dimension_numbers<[1], [1], [0], [0], [0, 0, 1, 0], [], []>} : vector<8x32xf32>, vector<32x32xf32>, vector<8x32xf32> -> vector<8x32xf32>
    %41 = arith.addf %40, %20 : vector<8x32xf32>
    %42 = math.tanh %41 : vector<8x32xf32>
    %cst_20 = arith.constant dense<0.000000e+00> : vector<8x32xf32>
    %43 = tpu.matmul %42, %2, %cst_20 {dimension_numbers = #tpu.dot_dimension_numbers<[1], [1], [0], [0], [0, 0, 1, 0], [], []>} : vector<8x32xf32>, vector<32x32xf32>, vector<8x32xf32> -> vector<8x32xf32>
    %44 = arith.addf %43, %23 : vector<8x32xf32>
    %45 = math.tanh %44 : vector<8x32xf32>
    %cst_21 = arith.constant dense<0.000000e+00> : vector<8x32xf32>
    %46 = tpu.matmul %45, %2, %cst_21 {dimension_numbers = #tpu.dot_dimension_numbers<[1], [1], [0], [0], [0, 0, 1, 0], [], []>} : vector<8x32xf32>, vector<32x32xf32>, vector<8x32xf32> -> vector<8x32xf32>
    %47 = arith.addf %46, %26 : vector<8x32xf32>
    %48 = math.tanh %47 : vector<8x32xf32>
    %cst_22 = arith.constant dense<0.000000e+00> : vector<8x32xf32>
    %49 = tpu.matmul %48, %2, %cst_22 {dimension_numbers = #tpu.dot_dimension_numbers<[1], [1], [0], [0], [0, 0, 1, 0], [], []>} : vector<8x32xf32>, vector<32x32xf32>, vector<8x32xf32> -> vector<8x32xf32>
    %50 = arith.addf %49, %29 : vector<8x32xf32>
    %51 = math.tanh %50 : vector<8x32xf32>
    %c0_23 = arith.constant 0 : index
    %c0_24 = arith.constant 0 : index
    %52 = vector.load %arg3[%c0_23, %c0_24] : memref<32x10xf32, #tpu.memory_space<vmem>>, vector<32x10xf32>
    %cst_25 = arith.constant dense<0.000000e+00> : vector<8x10xf32>
    %53 = tpu.matmul %51, %52, %cst_25 {dimension_numbers = #tpu.dot_dimension_numbers<[1], [0], [0], [1], [0, 0, 1, 1], [], []>} : vector<8x32xf32>, vector<32x10xf32>, vector<8x10xf32> -> vector<8x10xf32>
    %c0_26 = arith.constant 0 : index
    %c0_27 = arith.constant 0 : index
    %54 = vector.load %arg5[%c0_26, %c0_27] : memref<1x10xf32, #tpu.memory_space<vmem>>, vector<1x10xf32>
    %55 = vector.broadcast %54 : vector<1x10xf32> to vector<8x10xf32>
    %56 = arith.addf %53, %55 : vector<8x10xf32>
    %c0_28 = arith.constant 0 : index
    %c0_29 = arith.constant 0 : index
    %57 = vector.load %arg6[%c0_28, %c0_29] : memref<8x10xf32, #tpu.memory_space<vmem>>, vector<8x10xf32>
    tpu.vector_store %arg6[%c0_28, %c0_29], %56 {strides = array<i32>} : memref<8x10xf32, #tpu.memory_space<vmem>>, vector<8x10xf32>,
    return
  }
}

</mosaic_0001>

<llo_original>
// kernel: tpu_custom_call.1
$region0: #{tpu_custom_call.1}
  #allocation0 [shape = 'u32[]', space=smem, size = 0x4, offset = 0x4, fixed_abs, tag = 'smem constant byte address 0x4 - core index']
  #allocation1 [shape = 'u32[144,128]{1,0:T(1,128)}', space=vmem, size = 0x12000, scoped, tag = 'internal scratch']
  %s0 = inlined_call_operand.vmem [shape: f32[8,8], index: 0, kind: input, shape index: {}]
  %s1 = inlined_call_operand.vmem [shape: f32[32,1], index: 1, kind: input, shape index: {}]
  %s2 = inlined_call_operand.vmem [shape: f32[32,32], index: 2, kind: input, shape index: {}]
  %s3 = inlined_call_operand.vmem [shape: f32[32,10], index: 3, kind: input, shape index: {}]
  %s4 = inlined_call_operand.vmem [shape: f32[32,1], index: 4, kind: input, shape index: {}]
  %s5 = inlined_call_operand.vmem [shape: f32[1,10], index: 5, kind: input, shape index: {}]
  %s6 = inlined_call_operand.hbm [shape: f32[8,10], index: 6, kind: output, shape index: {}]
  %s7 = sld [smem:[#allocation0]]
  $region34: #{tpu_custom_call.1} parent=0
    _
  %s9 = ssub.s32 1, %s7
  %s10 = scalar_select 0, %s9, %s7
  $region1: #{tpu_custom_call.1} parent=0
    #allocation2 [shape = 'u8[4096]{0}', space=vmem, size = 0x1000, scoped, tag = 'output window, operand 0, single buffered']
    #allocation3 [shape = 's32[1]{0}', space=sflag, size = 0x4, scoped, tag = 'scoped memory for tpu_custom_call.1']
    %11 = vsyncpa [#allocation3], 0
    // Predicated region
    $region2: #{tpu_custom_call.1} parent=1 // pred_check
      _
    $region3: #{tpu_custom_call.1} parent=1 // pred_check_branch
      %13 = sbr.rel (0) target = $region5
    $region4: #{tpu_custom_call.1} parent=1 // pred_region
      _
    $region5: #{tpu_custom_call.1} parent=1 // pred_fallthru
      _
    // Predicated region
    $region6: #{tpu_custom_call.1} parent=1 // pred_check
      _
    $region7: #{tpu_custom_call.1} parent=1 // pred_check_branch
      %15 = sbr.rel (0) target = $region9
    $region8: #{tpu_custom_call.1} parent=1 // pred_region
      _
    $region9: #{tpu_custom_call.1} parent=1 // pred_fallthru
      _
    // Predicated region
    $region10: #{tpu_custom_call.1} parent=1 // pred_check
      _
    $region11: #{tpu_custom_call.1} parent=1 // pred_check_branch
      %17 = sbr.rel (0) target = $region13
    $region12: #{tpu_custom_call.1} parent=1 // pred_region
      _
    $region13: #{tpu_custom_call.1} parent=1 // pred_fallthru
      _
    // Predicated region
    $region14: #{tpu_custom_call.1} parent=1 // pred_check
      _
    $region15: #{tpu_custom_call.1} parent=1 // pred_check_branch
      %19 = sbr.rel (0) target = $region17
    $region16: #{tpu_custom_call.1} parent=1 // pred_region
      _
    $region17: #{tpu_custom_call.1} parent=1 // pred_fallthru
      _
    // Predicated region
    $region18: #{tpu_custom_call.1} parent=1 // pred_check
      _
    $region19: #{tpu_custom_call.1} parent=1 // pred_check_branch
      %21 = sbr.rel (0) target = $region21
    $region20: #{tpu_custom_call.1} parent=1 // pred_region
      _
    $region21: #{tpu_custom_call.1} parent=1 // pred_fallthru
      _
    // Predicated region
    $region22: #{tpu_custom_call.1} parent=1 // pred_check
      _
    $region23: #{tpu_custom_call.1} parent=1 // pred_check_branch
      %23 = sbr.rel (0) target = $region25
    $region24: #{tpu_custom_call.1} parent=1 // pred_region
      _
    $region25: #{tpu_custom_call.1} parent=1 // pred_fallthru
      _
    %v24 = vld [vmem:[%s0] sm:$0xff]
    %v25 = vld [vmem:[%s1] sm:$0xff]
    %v26 = vld [vmem:[%s1 + $0x8] sm:$0xff]
    %v27 = vld [vmem:[%s1 + $0x10] sm:$0xff]
    %v28 = vld [vmem:[%s1 + $0x18] sm:$0xff]
    %v29 = vld [vmem:[%s2] sm:$0xff]
    %v30 = vld [vmem:[%s2 + $0x8] sm:$0xff]
    %v31 = vld [vmem:[%s2 + $0x10] sm:$0xff]
    %v32 = vld [vmem:[%s2 + $0x18] sm:$0xff]
    %v33 = vld [vmem:[%s4] sm:$0xff]
    %v34 = vld [vmem:[%s4 + $0x8] sm:$0xff]
    %v35 = vld [vmem:[%s4 + $0x10] sm:$0xff]
    %v36 = vld [vmem:[%s4 + $0x18] sm:$0xff]
    %vm37 = vcmask 7168
    %v39 = vsel %vm37, 1.0, 0
    %v42 = vsel %vm37, %v33, 0
    %v45 = vsel %vm37, %v34, 0
    %v48 = vsel %vm37, %v35, 0
    %v51 = vsel %vm37, %v36, 0
    %53 = vmatprep.subr.mxu0 0.0
    %54 = vmatpush1.xpose.msra.mxu0 %v42
    %55 = vmatprep.subr.mxu0 0.0
    %56 = vmatpush1.xpose.msra.mxu0 %v45
    %57 = vmatprep.subr.mxu0 0.0
    %58 = vmatpush1.xpose.msra.mxu0 %v48
    %59 = vmatprep.subr.mxu0 0.0
    %60 = vmatpush1.xpose.msra.mxu0 %v51
    %61 = vmatprep.subr.mxu0 0.0
    %62 = vmatpush1.xpose.msra.mxu0 0.0
    %63 = vmatprep.subr.mxu0 0.0
    %64 = vmatpush1.xpose.msra.mxu0 0.0
    %65 = vmatprep.subr.mxu0 0.0
    %66 = vmatpush1.xpose.msra.mxu0 0.0
    %67 = vmatprep.subr.mxu0 0.0
    %68 = vmatpush1.xpose.msra.mxu0 0.0
    %69 = vmatprep.subr.mxu0 0.0
    %70 = vmatpush1.xpose.msra.mxu0 0.0
    %71 = vmatprep.subr.mxu0 0.0
    %72 = vmatpush1.xpose.msra.mxu0 0.0
    %73 = vmatprep.subr.mxu0 0.0
    %74 = vmatpush1.xpose.msra.mxu0 0.0
    %75 = vmatprep.subr.mxu0 0.0
    %76 = vmatpush1.xpose.msra.mxu0 0.0
    %77 = vmatprep.subr.mxu0 0.0
    %78 = vmatpush1.xpose.msra.mxu0 0.0
    %79 = vmatprep.subr.mxu0 0.0
    %80 = vmatpush1.xpose.msra.mxu0 0.0
    %81 = vmatprep.subr.mxu0 0.0
    %82 = vmatpush1.xpose.msra.mxu0 0.0
    %83 = vmatprep.subr.mxu0 0.0
    %84 = vmatpush1.xpose.msra.mxu0 0.0
    %85 = vmatprep.subr.mxu0 0.0
    %86 = vmatpush1.xpose.msra.mxu0 0.0
    %87 = vmatprep.subr.mxu0 0.0
    %88 = vmatpush1.xpose.msra.mxu0 0.0
    %89 = vmatprep.subr.mxu0 0.0
    %90 = vmatpush1.xpose.msra.mxu0 0.0
    %91 = vmatprep.subr.mxu0 0.0
    %92 = vmatpush1.xpose.msra.mxu0 0.0
    %93 = vmatprep.subr.mxu0 0.0
    %94 = vmatpush1.xpose.msra.mxu0 0.0
    %95 = vmatprep.subr.mxu0 0.0
    %96 = vmatpush1.xpose.msra.mxu0 0.0
    %97 = vmatprep.subr.mxu0 0.0
    %98 = vmatpush1.xpose.msra.mxu0 0.0
    %99 = vmatprep.subr.mxu0 0.0
    %100 = vmatpush1.xpose.msra.mxu0 0.0
    %101 = vmatprep.subr.mxu0 0.0
    %102 = vmatpush1.xpose.msra.mxu0 0.0
    %103 = vmatprep.subr.mxu0 0.0
    %104 = vmatpush1.xpose.msra.mxu0 0.0
    %105 = vmatprep.subr.mxu0 0.0
    %106 = vmatpush1.xpose.msra.mxu0 0.0
    %107 = vmatprep.subr.mxu0 0.0
    %108 = vmatpush1.xpose.msra.mxu0 0.0
    %109 = vmatprep.subr.mxu0 0.0
    %110 = vmatpush1.xpose.msra.mxu0 0.0
    %111 = vmatprep.subr.mxu0 0.0
    %112 = vmatpush1.xpose.msra.mxu0 0.0
    %113 = vmatprep.subr.mxu0 0.0
    %114 = vmatpush1.xpose.msra.mxu0 0.0
    %115 = vmatprep.subr.mxu0 0.0
    %116 = vmatpush1.xpose.msra.mxu0 0.0
    %117 = vmatprep.mubr.f32.mxu0 0.0
    %118 = vmatmul.mubr.f32.gmra.mrb[0].mxu0 %v39
    %v119 = vpop.f32.mrb[0].mxu0
    %v120 = vadd.f32 0.0, %v119
    %v121 = vpop.f32.mrb[0].mxu0
    %122 = vdwg.mxu0
    %v124 = vsel %vm37, %v24, 0
    %v127 = vsel %vm37, %v25, 0
    %v130 = vsel %vm37, %v26, 0
    %v133 = vsel %vm37, %v27, 0
    %v136 = vsel %vm37, %v28, 0
    %138 = vmatprep.subr.mxu0 0.0
    %139 = vmatpush1.xpose.msra.mxu0 %v127
    %140 = vmatprep.subr.mxu0 0.0
    %141 = vmatpush1.xpose.msra.mxu0 %v130
    %142 = vmatprep.subr.mxu0 0.0
    %143 = vmatpush1.xpose.msra.mxu0 %v133
    %144 = vmatprep.subr.mxu0 0.0
    %145 = vmatpush1.xpose.msra.mxu0 %v136
    %146 = vmatprep.subr.mxu0 0.0
    %147 = vmatpush1.xpose.msra.mxu0 0.0
    %148 = vmatprep.subr.mxu0 0.0
    %149 = vmatpush1.xpose.msra.mxu0 0.0
    %150 = vmatprep.subr.mxu0 0.0
    %151 = vmatpush1.xpose.msra.mxu0 0.0
    %152 = vmatprep.subr.mxu0 0.0
    %153 = vmatpush1.xpose.msra.mxu0 0.0
    %154 = vmatprep.subr.mxu0 0.0
    %155 = vmatpush1.xpose.msra.mxu0 0.0
    %156 = vmatprep.subr.mxu0 0.0
    %157 = vmatpush1.xpose.msra.mxu0 0.0
    %158 = vmatprep.subr.mxu0 0.0
    %159 = vmatpush1.xpose.msra.mxu0 0.0
    %160 = vmatprep.subr.mxu0 0.0
    %161 = vmatpush1.xpose.msra.mxu0 0.0
    %162 = vmatprep.subr.mxu0 0.0
    %163 = vmatpush1.xpose.msra.mxu0 0.0
    %164 = vmatprep.subr.mxu0 0.0
    %165 = vmatpush1.xpose.msra.mxu0 0.0
    %166 = vmatprep.subr.mxu0 0.0
    %167 = vmatpush1.xpose.msra.mxu0 0.0
    %168 = vmatprep.subr.mxu0 0.0
    %169 = vmatpush1.xpose.msra.mxu0 0.0
    %170 = vmatprep.subr.mxu0 0.0
    %171 = vmatpush1.xpose.msra.mxu0 0.0
    %172 = vmatprep.subr.mxu0 0.0
    %173 = vmatpush1.xpose.msra.mxu0 0.0
    %174 = vmatprep.subr.mxu0 0.0
    %175 = vmatpush1.xpose.msra.mxu0 0.0
    %176 = vmatprep.subr.mxu0 0.0
    %177 = vmatpush1.xpose.msra.mxu0 0.0
    %178 = vmatprep.subr.mxu0 0.0
    %179 = vmatpush1.xpose.msra.mxu0 0.0
    %180 = vmatprep.subr.mxu0 0.0
    %181 = vmatpush1.xpose.msra.mxu0 0.0
    %182 = vmatprep.subr.mxu0 0.0
    %183 = vmatpush1.xpose.msra.mxu0 0.0
    %184 = vmatprep.subr.mxu0 0.0
    %185 = vmatpush1.xpose.msra.mxu0 0.0
    %186 = vmatprep.subr.mxu0 0.0
    %187 = vmatpush1.xpose.msra.mxu0 0.0
    %188 = vmatprep.subr.mxu0 0.0
    %189 = vmatpush1.xpose.msra.mxu0 0.0
    %190 = vmatprep.subr.mxu0 0.0
    %191 = vmatpush1.xpose.msra.mxu0 0.0
    %192 = vmatprep.subr.mxu0 0.0
    %193 = vmatpush1.xpose.msra.mxu0 0.0
    %194 = vmatprep.subr.mxu0 0.0
    %195 = vmatpush1.xpose.msra.mxu0 0.0
    %196 = vmatprep.subr.mxu0 0.0
    %197 = vmatpush1.xpose.msra.mxu0 0.0
    %198 = vmatprep.subr.mxu0 0.0
    %199 = vmatpush1.xpose.msra.mxu0 0.0
    %200 = vmatprep.subr.mxu0 0.0
    %201 = vmatpush1.xpose.msra.mxu0 0.0
    %202 = vmatprep.mubr.f32.mxu0 0.0
    %203 = vmatmul.mubr.f32.gmra.mrb[0].mxu0 %v124
    %v204 = vpop.f32.mrb[0].mxu0
    %v205 = vadd.f32 %v120, %v204
    %v206 = vpop.f32.mrb[0].mxu0
    %207 = vdwg.mxu0
    %208 = vrot.lane.b32.xlu0 %v24, 127
    %v209 = vpop.permute.xlu0 %208
    %v210 = vsel %vm37, %v209, 0
    %212 = vmatprep.subr.mxu0 0.0
    %213 = vmatpush1.xpose.msra.mxu0 %v127
    %214 = vmatprep.subr.mxu0 0.0
    %215 = vmatpush1.xpose.msra.mxu0 %v130
    %216 = vmatprep.subr.mxu0 0.0
    %217 = vmatpush1.xpose.msra.mxu0 %v133
    %218 = vmatprep.subr.mxu0 0.0
    %219 = vmatpush1.xpose.msra.mxu0 %v136
    %220 = vmatprep.subr.mxu0 0.0
    %221 = vmatpush1.xpose.msra.mxu0 0.0
    %222 = vmatprep.subr.mxu0 0.0
    %223 = vmatpush1.xpose.msra.mxu0 0.0
    %224 = vmatprep.subr.mxu0 0.0
    %225 = vmatpush1.xpose.msra.mxu0 0.0
    %226 = vmatprep.subr.mxu0 0.0
    %227 = vmatpush1.xpose.msra.mxu0 0.0
    %228 = vmatprep.subr.mxu0 0.0
    %229 = vmatpush1.xpose.msra.mxu0 0.0
    %230 = vmatprep.subr.mxu0 0.0
    %231 = vmatpush1.xpose.msra.mxu0 0.0
    %232 = vmatprep.subr.mxu0 0.0
    %233 = vmatpush1.xpose.msra.mxu0 0.0
    %234 = vmatprep.subr.mxu0 0.0
    %235 = vmatpush1.xpose.msra.mxu0 0.0
    %236 = vmatprep.subr.mxu0 0.0
    %237 = vmatpush1.xpose.msra.mxu0 0.0
    %238 = vmatprep.subr.mxu0 0.0
    %239 = vmatpush1.xpose.msra.mxu0 0.0
    %240 = vmatprep.subr.mxu0 0.0
    %241 = vmatpush1.xpose.msra.mxu0 0.0
    %242 = vmatprep.subr.mxu0 0.0
    %243 = vmatpush1.xpose.msra.mxu0 0.0
    %244 = vmatprep.subr.mxu0 0.0
    %245 = vmatpush1.xpose.msra.mxu0 0.0
    %246 = vmatprep.subr.mxu0 0.0
    %247 = vmatpush1.xpose.msra.mxu0 0.0
    %248 = vmatprep.subr.mxu0 0.0
    %249 = vmatpush1.xpose.msra.mxu0 0.0
    %250 = vmatprep.subr.mxu0 0.0
    %251 = vmatpush1.xpose.msra.mxu0 0.0
    %252 = vmatprep.subr.mxu0 0.0
    %253 = vmatpush1.xpose.msra.mxu0 0.0
    %254 = vmatprep.subr.mxu0 0.0
    %255 = vmatpush1.xpose.msra.mxu0 0.0
    %256 = vmatprep.subr.mxu0 0.0
    %257 = vmatpush1.xpose.msra.mxu0 0.0
    %258 = vmatprep.subr.mxu0 0.0
    %259 = vmatpush1.xpose.msra.mxu0 0.0
    %260 = vmatprep.subr.mxu0 0.0
    %261 = vmatpush1.xpose.msra.mxu0 0.0
    %262 = vmatprep.subr.mxu0 0.0
    %263 = vmatpush1.xpose.msra.mxu0 0.0
    %264 = vmatprep.subr.mxu0 0.0
    %265 = vmatpush1.xpose.msra.mxu0 0.0
    %266 = vmatprep.subr.mxu0 0.0
    %267 = vmatpush1.xpose.msra.mxu0 0.0
    %268 = vmatprep.subr.mxu0 0.0
    %269 = vmatpush1.xpose.msra.mxu0 0.0
    %270 = vmatprep.subr.mxu0 0.0
    %271 = vmatpush1.xpose.msra.mxu0 0.0
    %272 = vmatprep.subr.mxu0 0.0
    %273 = vmatpush1.xpose.msra.mxu0 0.0
    %274 = vmatprep.subr.mxu0 0.0
    %275 = vmatpush1.xpose.msra.mxu0 0.0
    %276 = vmatprep.mubr.f32.mxu0 0.0
    %277 = vmatmul.mubr.f32.gmra.mrb[0].mxu0 %v210
    %v278 = vpop.f32.mrb[0].mxu0
    %v279 = vadd.f32 %v120, %v278
    %v280 = vpop.f32.mrb[0].mxu0
    %281 = vdwg.mxu0
    %282 = vrot.lane.b32.xlu0 %v24, 126
    %v283 = vpop.permute.xlu0 %282
    %v284 = vsel %vm37, %v283, 0
    %286 = vmatprep.subr.mxu0 0.0
    %287 = vmatpush1.xpose.msra.mxu0 %v127
    %288 = vmatprep.subr.mxu0 0.0
    %289 = vmatpush1.xpose.msra.mxu0 %v130
    %290 = vmatprep.subr.mxu0 0.0
    %291 = vmatpush1.xpose.msra.mxu0 %v133
    %292 = vmatprep.subr.mxu0 0.0
    %293 = vmatpush1.xpose.msra.mxu0 %v136
    %294 = vmatprep.subr.mxu0 0.0
    %295 = vmatpush1.xpose.msra.mxu0 0.0
    %296 = vmatprep.subr.mxu0 0.0
    %297 = vmatpush1.xpose.msra.mxu0 0.0
    %298 = vmatprep.subr.mxu0 0.0
    %299 = vmatpush1.xpose.msra.mxu0 0.0
    %300 = vmatprep.subr.mxu0 0.0
    %301 = vmatpush1.xpose.msra.mxu0 0.0
    %302 = vmatprep.subr.mxu0 0.0
    %303 = vmatpush1.xpose.msra.mxu0 0.0
    %304 = vmatprep.subr.mxu0 0.0
    %305 = vmatpush1.xpose.msra.mxu0 0.0
    %306 = vmatprep.subr.mxu0 0.0
    %307 = vmatpush1.xpose.msra.mxu0 0.0
    %308 = vmatprep.subr.mxu0 0.0
    %309 = vmatpush1.xpose.msra.mxu0 0.0
    %310 = vmatprep.subr.mxu0 0.0
    %311 = vmatpush1.xpose.msra.mxu0 0.0
    %312 = vmatprep.subr.mxu0 0.0
    %313 = vmatpush1.xpose.msra.mxu0 0.0
    %314 = vmatprep.subr.mxu0 0.0
    %315 = vmatpush1.xpose.msra.mxu0 0.0
    %316 = vmatprep.subr.mxu0 0.0
    %317 = vmatpush1.xpose.msra.mxu0 0.0
    %318 = vmatprep.subr.mxu0 0.0
    %319 = vmatpush1.xpose.msra.mxu0 0.0
    %320 = vmatprep.subr.mxu0 0.0
    %321 = vmatpush1.xpose.msra.mxu0 0.0
    %322 = vmatprep.subr.mxu0 0.0
    %323 = vmatpush1.xpose.msra.mxu0 0.0
    %324 = vmatprep.subr.mxu0 0.0
    %325 = vmatpush1.xpose.msra.mxu0 0.0
    %326 = vmatprep.subr.mxu0 0.0
    %327 = vmatpush1.xpose.msra.mxu0 0.0
    %328 = vmatprep.subr.mxu0 0.0
    %329 = vmatpush1.xpose.msra.mxu0 0.0
    %330 = vmatprep.subr.mxu0 0.0
    %331 = vmatpush1.xpose.msra.mxu0 0.0
    %332 = vmatprep.subr.mxu0 0.0
    %333 = vmatpush1.xpose.msra.mxu0 0.0
    %334 = vmatprep.subr.mxu0 0.0
    %335 = vmatpush1.xpose.msra.mxu0 0.0
    %336 = vmatprep.subr.mxu0 0.0
    %337 = vmatpush1.xpose.msra.mxu0 0.0
    %338 = vmatprep.subr.mxu0 0.0
    %339 = vmatpush1.xpose.msra.mxu0 0.0
    %340 = vmatprep.subr.mxu0 0.0
    %341 = vmatpush1.xpose.msra.mxu0 0.0
    %342 = vmatprep.subr.mxu0 0.0
    %343 = vmatpush1.xpose.msra.mxu0 0.0
    %344 = vmatprep.subr.mxu0 0.0
    %345 = vmatpush1.xpose.msra.mxu0 0.0
    %346 = vmatprep.subr.mxu0 0.0
    %347 = vmatpush1.xpose.msra.mxu0 0.0
    %348 = vmatprep.subr.mxu0 0.0
    %349 = vmatpush1.xpose.msra.mxu0 0.0
    %350 = vmatprep.mubr.f32.mxu0 0.0
    %351 = vmatmul.mubr.f32.gmra.mrb[0].mxu0 %v284
    %v352 = vpop.f32.mrb[0].mxu0
    %v353 = vadd.f32 %v120, %v352
    %v354 = vpop.f32.mrb[0].mxu0
    %355 = vdwg.mxu0
    %356 = vrot.lane.b32.xlu0 %v24, 125
    %v357 = vpop.permute.xlu0 %356
    %v358 = vsel %vm37, %v357, 0
    %360 = vmatprep.subr.mxu0 0.0
    %361 = vmatpush1.xpose.msra.mxu0 %v127
    %362 = vmatprep.subr.mxu0 0.0
    %363 = vmatpush1.xpose.msra.mxu0 %v130
    %364 = vmatprep.subr.mxu0 0.0
    %365 = vmatpush1.xpose.msra.mxu0 %v133
    %366 = vmatprep.subr.mxu0 0.0
    %367 = vmatpush1.xpose.msra.mxu0 %v136
    %368 = vmatprep.subr.mxu0 0.0
    %369 = vmatpush1.xpose.msra.mxu0 0.0
    %370 = vmatprep.subr.mxu0 0.0
    %371 = vmatpush1.xpose.msra.mxu0 0.0
    %372 = vmatprep.subr.mxu0 0.0
    %373 = vmatpush1.xpose.msra.mxu0 0.0
    %374 = vmatprep.subr.mxu0 0.0
    %375 = vmatpush1.xpose.msra.mxu0 0.0
    %376 = vmatprep.subr.mxu0 0.0
    %377 = vmatpush1.xpose.msra.mxu0 0.0
    %378 = vmatprep.subr.mxu0 0.0
    %379 = vmatpush1.xpose.msra.mxu0 0.0
    %380 = vmatprep.subr.mxu0 0.0
    %381 = vmatpush1.xpose.msra.mxu0 0.0
    %382 = vmatprep.subr.mxu0 0.0
    %383 = vmatpush1.xpose.msra.mxu0 0.0
    %384 = vmatprep.subr.mxu0 0.0
    %385 = vmatpush1.xpose.msra.mxu0 0.0
    %386 = vmatprep.subr.mxu0 0.0
    %387 = vmatpush1.xpose.msra.mxu0 0.0
    %388 = vmatprep.subr.mxu0 0.0
    %389 = vmatpush1.xpose.msra.mxu0 0.0
    %390 = vmatprep.subr.mxu0 0.0
    %391 = vmatpush1.xpose.msra.mxu0 0.0
    %392 = vmatprep.subr.mxu0 0.0
    %393 = vmatpush1.xpose.msra.mxu0 0.0
    %394 = vmatprep.subr.mxu0 0.0
    %395 = vmatpush1.xpose.msra.mxu0 0.0
    %396 = vmatprep.subr.mxu0 0.0
    %397 = vmatpush1.xpose.msra.mxu0 0.0
    %398 = vmatprep.subr.mxu0 0.0
    %399 = vmatpush1.xpose.msra.mxu0 0.0
    %400 = vmatprep.subr.mxu0 0.0
    %401 = vmatpush1.xpose.msra.mxu0 0.0
    %402 = vmatprep.subr.mxu0 0.0
    %403 = vmatpush1.xpose.msra.mxu0 0.0
    %404 = vmatprep.subr.mxu0 0.0
    %405 = vmatpush1.xpose.msra.mxu0 0.0
    %406 = vmatprep.subr.mxu0 0.0
    %407 = vmatpush1.xpose.msra.mxu0 0.0
    %408 = vmatprep.subr.mxu0 0.0
    %409 = vmatpush1.xpose.msra.mxu0 0.0
    %410 = vmatprep.subr.mxu0 0.0
    %411 = vmatpush1.xpose.msra.mxu0 0.0
    %412 = vmatprep.subr.mxu0 0.0
    %413 = vmatpush1.xpose.msra.mxu0 0.0
    %414 = vmatprep.subr.mxu0 0.0
    %415 = vmatpush1.xpose.msra.mxu0 0.0
    %416 = vmatprep.subr.mxu0 0.0
    %417 = vmatpush1.xpose.msra.mxu0 0.0
    %418 = vmatprep.subr.mxu0 0.0
    %419 = vmatpush1.xpose.msra.mxu0 0.0
    %420 = vmatprep.subr.mxu0 0.0
    %421 = vmatpush1.xpose.msra.mxu0 0.0
    %422 = vmatprep.subr.mxu0 0.0
    %423 = vmatpush1.xpose.msra.mxu0 0.0
    %424 = vmatprep.mubr.f32.mxu0 0.0
    %425 = vmatmul.mubr.f32.gmra.mrb[0].mxu0 %v358
    %v426 = vpop.f32.mrb[0].mxu0
    %v427 = vadd.f32 %v120, %v426
    %v428 = vpop.f32.mrb[0].mxu0
    %429 = vdwg.mxu0
    %430 = vrot.lane.b32.xlu0 %v24, 124
    %v431 = vpop.permute.xlu0 %430
    %v432 = vsel %vm37, %v431, 0
    %434 = vmatprep.subr.mxu0 0.0
    %435 = vmatpush1.xpose.msra.mxu0 %v127
    %436 = vmatprep.subr.mxu0 0.0
    %437 = vmatpush1.xpose.msra.mxu0 %v130
    %438 = vmatprep.subr.mxu0 0.0
    %439 = vmatpush1.xpose.msra.mxu0 %v133
    %440 = vmatprep.subr.mxu0 0.0
    %441 = vmatpush1.xpose.msra.mxu0 %v136
    %442 = vmatprep.subr.mxu0 0.0
    %443 = vmatpush1.xpose.msra.mxu0 0.0
    %444 = vmatprep.subr.mxu0 0.0
    %445 = vmatpush1.xpose.msra.mxu0 0.0
    %446 = vmatprep.subr.mxu0 0.0
    %447 = vmatpush1.xpose.msra.mxu0 0.0
    %448 = vmatprep.subr.mxu0 0.0
    %449 = vmatpush1.xpose.msra.mxu0 0.0
    %450 = vmatprep.subr.mxu0 0.0
    %451 = vmatpush1.xpose.msra.mxu0 0.0
    %452 = vmatprep.subr.mxu0 0.0
    %453 = vmatpush1.xpose.msra.mxu0 0.0
    %454 = vmatprep.subr.mxu0 0.0
    %455 = vmatpush1.xpose.msra.mxu0 0.0
    %456 = vmatprep.subr.mxu0 0.0
    %457 = vmatpush1.xpose.msra.mxu0 0.0
    %458 = vmatprep.subr.mxu0 0.0
    %459 = vmatpush1.xpose.msra.mxu0 0.0
    %460 = vmatprep.subr.mxu0 0.0
    %461 = vmatpush1.xpose.msra.mxu0 0.0
    %462 = vmatprep.subr.mxu0 0.0
    %463 = vmatpush1.xpose.msra.mxu0 0.0
    %464 = vmatprep.subr.mxu0 0.0
    %465 = vmatpush1.xpose.msra.mxu0 0.0
    %466 = vmatprep.subr.mxu0 0.0
    %467 = vmatpush1.xpose.msra.mxu0 0.0
    %468 = vmatprep.subr.mxu0 0.0
    %469 = vmatpush1.xpose.msra.mxu0 0.0
    %470 = vmatprep.subr.mxu0 0.0
    %471 = vmatpush1.xpose.msra.mxu0 0.0
    %472 = vmatprep.subr.mxu0 0.0
    %473 = vmatpush1.xpose.msra.mxu0 0.0
    %474 = vmatprep.subr.mxu0 0.0
    %475 = vmatpush1.xpose.msra.mxu0 0.0
    %476 = vmatprep.subr.mxu0 0.0
    %477 = vmatpush1.xpose.msra.mxu0 0.0
    %478 = vmatprep.subr.mxu0 0.0
    %479 = vmatpush1.xpose.msra.mxu0 0.0
    %480 = vmatprep.subr.mxu0 0.0
    %481 = vmatpush1.xpose.msra.mxu0 0.0
    %482 = vmatprep.subr.mxu0 0.0
    %483 = vmatpush1.xpose.msra.mxu0 0.0
    %484 = vmatprep.subr.mxu0 0.0
    %485 = vmatpush1.xpose.msra.mxu0 0.0
    %486 = vmatprep.subr.mxu0 0.0
    %487 = vmatpush1.xpose.msra.mxu0 0.0
    %488 = vmatprep.subr.mxu0 0.0
    %489 = vmatpush1.xpose.msra.mxu0 0.0
    %490 = vmatprep.subr.mxu0 0.0
    %491 = vmatpush1.xpose.msra.mxu0 0.0
    %492 = vmatprep.subr.mxu0 0.0
    %493 = vmatpush1.xpose.msra.mxu0 0.0
    %494 = vmatprep.subr.mxu0 0.0
    %495 = vmatpush1.xpose.msra.mxu0 0.0
    %496 = vmatprep.subr.mxu0 0.0
    %497 = vmatpush1.xpose.msra.mxu0 0.0
    %498 = vmatprep.mubr.f32.mxu0 0.0
    %499 = vmatmul.mubr.f32.gmra.mrb[0].mxu0 %v432
    %v500 = vpop.f32.mrb[0].mxu0
    %v501 = vadd.f32 %v120, %v500
    %v502 = vpop.f32.mrb[0].mxu0
    %503 = vdwg.mxu0
    %504 = vrot.lane.b32.xlu0 %v24, 123
    %v505 = vpop.permute.xlu0 %504
    %v506 = vsel %vm37, %v505, 0
    %508 = vmatprep.subr.mxu0 0.0
    %509 = vmatpush1.xpose.msra.mxu0 %v127
    %510 = vmatprep.subr.mxu0 0.0
    %511 = vmatpush1.xpose.msra.mxu0 %v130
    %512 = vmatprep.subr.mxu0 0.0
    %513 = vmatpush1.xpose.msra.mxu0 %v133
    %514 = vmatprep.subr.mxu0 0.0
    %515 = vmatpush1.xpose.msra.mxu0 %v136
    %516 = vmatprep.subr.mxu0 0.0
    %517 = vmatpush1.xpose.msra.mxu0 0.0
    %518 = vmatprep.subr.mxu0 0.0
    %519 = vmatpush1.xpose.msra.mxu0 0.0
    %520 = vmatprep.subr.mxu0 0.0
    %521 = vmatpush1.xpose.msra.mxu0 0.0
    %522 = vmatprep.subr.mxu0 0.0
    %523 = vmatpush1.xpose.msra.mxu0 0.0
    %524 = vmatprep.subr.mxu0 0.0
    %525 = vmatpush1.xpose.msra.mxu0 0.0
    %526 = vmatprep.subr.mxu0 0.0
    %527 = vmatpush1.xpose.msra.mxu0 0.0
    %528 = vmatprep.subr.mxu0 0.0
    %529 = vmatpush1.xpose.msra.mxu0 0.0
    %530 = vmatprep.subr.mxu0 0.0
    %531 = vmatpush1.xpose.msra.mxu0 0.0
    %532 = vmatprep.subr.mxu0 0.0
    %533 = vmatpush1.xpose.msra.mxu0 0.0
    %534 = vmatprep.subr.mxu0 0.0
    %535 = vmatpush1.xpose.msra.mxu0 0.0
    %536 = vmatprep.subr.mxu0 0.0
    %537 = vmatpush1.xpose.msra.mxu0 0.0
    %538 = vmatprep.subr.mxu0 0.0
    %539 = vmatpush1.xpose.msra.mxu0 0.0
    %540 = vmatprep.subr.mxu0 0.0
    %541 = vmatpush1.xpose.msra.mxu0 0.0
    %542 = vmatprep.subr.mxu0 0.0
    %543 = vmatpush1.xpose.msra.mxu0 0.0
    %544 = vmatprep.subr.mxu0 0.0
    %545 = vmatpush1.xpose.msra.mxu0 0.0
    %546 = vmatprep.subr.mxu0 0.0
    %547 = vmatpush1.xpose.msra.mxu0 0.0
    %548 = vmatprep.subr.mxu0 0.0
    %549 = vmatpush1.xpose.msra.mxu0 0.0
    %550 = vmatprep.subr.mxu0 0.0
    %551 = vmatpush1.xpose.msra.mxu0 0.0
    %552 = vmatprep.subr.mxu0 0.0
    %553 = vmatpush1.xpose.msra.mxu0 0.0
    %554 = vmatprep.subr.mxu0 0.0
    %555 = vmatpush1.xpose.msra.mxu0 0.0
    %556 = vmatprep.subr.mxu0 0.0
    %557 = vmatpush1.xpose.msra.mxu0 0.0
    %558 = vmatprep.subr.mxu0 0.0
    %559 = vmatpush1.xpose.msra.mxu0 0.0
    %560 = vmatprep.subr.mxu0 0.0
    %561 = vmatpush1.xpose.msra.mxu0 0.0
    %562 = vmatprep.subr.mxu0 0.0
    %563 = vmatpush1.xpose.msra.mxu0 0.0
    %564 = vmatprep.subr.mxu0 0.0
    %565 = vmatpush1.xpose.msra.mxu0 0.0
    %566 = vmatprep.subr.mxu0 0.0
    %567 = vmatpush1.xpose.msra.mxu0 0.0
    %568 = vmatprep.subr.mxu0 0.0
    %569 = vmatpush1.xpose.msra.mxu0 0.0
    %570 = vmatprep.subr.mxu0 0.0
    %571 = vmatpush1.xpose.msra.mxu0 0.0
    %572 = vmatprep.mubr.f32.mxu0 0.0
    %573 = vmatmul.mubr.f32.gmra.mrb[0].mxu0 %v506
    %v574 = vpop.f32.mrb[0].mxu0
    %v575 = vadd.f32 %v120, %v574
    %v576 = vpop.f32.mrb[0].mxu0
    %577 = vdwg.mxu0
    %578 = vrot.lane.b32.xlu0 %v24, 122
    %v579 = vpop.permute.xlu0 %578
    %v580 = vsel %vm37, %v579, 0
    %582 = vmatprep.subr.mxu0 0.0
    %583 = vmatpush1.xpose.msra.mxu0 %v127
    %584 = vmatprep.subr.mxu0 0.0
    %585 = vmatpush1.xpose.msra.mxu0 %v130
    %586 = vmatprep.subr.mxu0 0.0
    %587 = vmatpush1.xpose.msra.mxu0 %v133
    %588 = vmatprep.subr.mxu0 0.0
    %589 = vmatpush1.xpose.msra.mxu0 %v136
    %590 = vmatprep.subr.mxu0 0.0
    %591 = vmatpush1.xpose.msra.mxu0 0.0
    %592 = vmatprep.subr.mxu0 0.0
    %593 = vmatpush1.xpose.msra.mxu0 0.0
    %594 = vmatprep.subr.mxu0 0.0
    %595 = vmatpush1.xpose.msra.mxu0 0.0
    %596 = vmatprep.subr.mxu0 0.0
    %597 = vmatpush1.xpose.msra.mxu0 0.0
    %598 = vmatprep.subr.mxu0 0.0
    %599 = vmatpush1.xpose.msra.mxu0 0.0
    %600 = vmatprep.subr.mxu0 0.0
    %601 = vmatpush1.xpose.msra.mxu0 0.0
    %602 = vmatprep.subr.mxu0 0.0
    %603 = vmatpush1.xpose.msra.mxu0 0.0
    %604 = vmatprep.subr.mxu0 0.0
    %605 = vmatpush1.xpose.msra.mxu0 0.0
    %606 = vmatprep.subr.mxu0 0.0
    %607 = vmatpush1.xpose.msra.mxu0 0.0
    %608 = vmatprep.subr.mxu0 0.0
    %609 = vmatpush1.xpose.msra.mxu0 0.0
    %610 = vmatprep.subr.mxu0 0.0
    %611 = vmatpush1.xpose.msra.mxu0 0.0
    %612 = vmatprep.subr.mxu0 0.0
    %613 = vmatpush1.xpose.msra.mxu0 0.0
    %614 = vmatprep.subr.mxu0 0.0
    %615 = vmatpush1.xpose.msra.mxu0 0.0
    %616 = vmatprep.subr.mxu0 0.0
    %617 = vmatpush1.xpose.msra.mxu0 0.0
    %618 = vmatprep.subr.mxu0 0.0
    %619 = vmatpush1.xpose.msra.mxu0 0.0
    %620 = vmatprep.subr.mxu0 0.0
    %621 = vmatpush1.xpose.msra.mxu0 0.0
    %622 = vmatprep.subr.mxu0 0.0
    %623 = vmatpush1.xpose.msra.mxu0 0.0
    %624 = vmatprep.subr.mxu0 0.0
    %625 = vmatpush1.xpose.msra.mxu0 0.0
    %626 = vmatprep.subr.mxu0 0.0
    %627 = vmatpush1.xpose.msra.mxu0 0.0
    %628 = vmatprep.subr.mxu0 0.0
    %629 = vmatpush1.xpose.msra.mxu0 0.0
    %630 = vmatprep.subr.mxu0 0.0
    %631 = vmatpush1.xpose.msra.mxu0 0.0
    %632 = vmatprep.subr.mxu0 0.0
    %633 = vmatpush1.xpose.msra.mxu0 0.0
    %634 = vmatprep.subr.mxu0 0.0
    %635 = vmatpush1.xpose.msra.mxu0 0.0
    %636 = vmatprep.subr.mxu0 0.0
    %637 = vmatpush1.xpose.msra.mxu0 0.0
    %638 = vmatprep.subr.mxu0 0.0
    %639 = vmatpush1.xpose.msra.mxu0 0.0
    %640 = vmatprep.subr.mxu0 0.0
    %641 = vmatpush1.xpose.msra.mxu0 0.0
    %642 = vmatprep.subr.mxu0 0.0
    %643 = vmatpush1.xpose.msra.mxu0 0.0
    %644 = vmatprep.subr.mxu0 0.0
    %645 = vmatpush1.xpose.msra.mxu0 0.0
    %646 = vmatprep.mubr.f32.mxu0 0.0
    %647 = vmatmul.mubr.f32.gmra.mrb[0].mxu0 %v580
    %v648 = vpop.f32.mrb[0].mxu0
    %v649 = vadd.f32 %v120, %v648
    %v650 = vpop.f32.mrb[0].mxu0
    %651 = vdwg.mxu0
    %652 = vrot.lane.b32.xlu0 %v24, 121
    %v653 = vpop.permute.xlu0 %652
    %v654 = vsel %vm37, %v653, 0
    %656 = vmatprep.subr.mxu0 0.0
    %657 = vmatpush1.xpose.msra.mxu0 %v127
    %658 = vmatprep.subr.mxu0 0.0
    %659 = vmatpush1.xpose.msra.mxu0 %v130
    %660 = vmatprep.subr.mxu0 0.0
    %661 = vmatpush1.xpose.msra.mxu0 %v133
    %662 = vmatprep.subr.mxu0 0.0
    %663 = vmatpush1.xpose.msra.mxu0 %v136
    %664 = vmatprep.subr.mxu0 0.0
    %665 = vmatpush1.xpose.msra.mxu0 0.0
    %666 = vmatprep.subr.mxu0 0.0
    %667 = vmatpush1.xpose.msra.mxu0 0.0
    %668 = vmatprep.subr.mxu0 0.0
    %669 = vmatpush1.xpose.msra.mxu0 0.0
    %670 = vmatprep.subr.mxu0 0.0
    %671 = vmatpush1.xpose.msra.mxu0 0.0
    %672 = vmatprep.subr.mxu0 0.0
    %673 = vmatpush1.xpose.msra.mxu0 0.0
    %674 = vmatprep.subr.mxu0 0.0
    %675 = vmatpush1.xpose.msra.mxu0 0.0
    %676 = vmatprep.subr.mxu0 0.0
    %677 = vmatpush1.xpose.msra.mxu0 0.0
    %678 = vmatprep.subr.mxu0 0.0
    %679 = vmatpush1.xpose.msra.mxu0 0.0
    %680 = vmatprep.subr.mxu0 0.0
    %681 = vmatpush1.xpose.msra.mxu0 0.0
    %682 = vmatprep.subr.mxu0 0.0
    %683 = vmatpush1.xpose.msra.mxu0 0.0
    %684 = vmatprep.subr.mxu0 0.0
    %685 = vmatpush1.xpose.msra.mxu0 0.0
    %686 = vmatprep.subr.mxu0 0.0
    %687 = vmatpush1.xpose.msra.mxu0 0.0
    %688 = vmatprep.subr.mxu0 0.0
    %689 = vmatpush1.xpose.msra.mxu0 0.0
    %690 = vmatprep.subr.mxu0 0.0
    %691 = vmatpush1.xpose.msra.mxu0 0.0
    %692 = vmatprep.subr.mxu0 0.0
    %693 = vmatpush1.xpose.msra.mxu0 0.0
    %694 = vmatprep.subr.mxu0 0.0
    %695 = vmatpush1.xpose.msra.mxu0 0.0
    %696 = vmatprep.subr.mxu0 0.0
    %697 = vmatpush1.xpose.msra.mxu0 0.0
    %698 = vmatprep.subr.mxu0 0.0
    %699 = vmatpush1.xpose.msra.mxu0 0.0
    %700 = vmatprep.subr.mxu0 0.0
    %701 = vmatpush1.xpose.msra.mxu0 0.0
    %702 = vmatprep.subr.mxu0 0.0
    %703 = vmatpush1.xpose.msra.mxu0 0.0
    %704 = vmatprep.subr.mxu0 0.0
    %705 = vmatpush1.xpose.msra.mxu0 0.0
    %706 = vmatprep.subr.mxu0 0.0
    %707 = vmatpush1.xpose.msra.mxu0 0.0
    %708 = vmatprep.subr.mxu0 0.0
    %709 = vmatpush1.xpose.msra.mxu0 0.0
    %710 = vmatprep.subr.mxu0 0.0
    %711 = vmatpush1.xpose.msra.mxu0 0.0
    %712 = vmatprep.subr.mxu0 0.0
    %713 = vmatpush1.xpose.msra.mxu0 0.0
    %714 = vmatprep.subr.mxu0 0.0
    %715 = vmatpush1.xpose.msra.mxu0 0.0
    %716 = vmatprep.subr.mxu0 0.0
    %717 = vmatpush1.xpose.msra.mxu0 0.0
    %718 = vmatprep.subr.mxu0 0.0
    %719 = vmatpush1.xpose.msra.mxu0 0.0
    %720 = vmatprep.mubr.f32.mxu0 0.0
    %721 = vmatmul.mubr.f32.gmra.mrb[0].mxu0 %v654
    %v722 = vpop.f32.mrb[0].mxu0
    %v723 = vadd.f32 %v120, %v722
    %v724 = vpop.f32.mrb[0].mxu0
    %725 = vdwg.mxu0
    %v726 = vtanh.pop %v205
    %vm727 = vcmask 261120
    %v729 = vsel %vm727, %v726, 0
    %v732 = vsel %vm727, %v29, 0
    %v735 = vsel %vm727, %v30, 0
    %v738 = vsel %vm727, %v31, 0
    %v741 = vsel %vm727, %v32, 0
    %743 = vmatprep.subr.mxu0 0.0
    %744 = vmatpush1.xpose.msra.mxu0 %v732
    %745 = vmatprep.subr.mxu0 0.0
    %746 = vmatpush1.xpose.msra.mxu0 %v735
    %747 = vmatprep.subr.mxu0 0.0
    %748 = vmatpush1.xpose.msra.mxu0 %v738
    %749 = vmatprep.subr.mxu0 0.0
    %750 = vmatpush1.xpose.msra.mxu0 %v741
    %751 = vmatprep.subr.mxu0 0.0
    %752 = vmatpush1.xpose.msra.mxu0 0.0
    %753 = vmatprep.subr.mxu0 0.0
    %754 = vmatpush1.xpose.msra.mxu0 0.0
    %755 = vmatprep.subr.mxu0 0.0
    %756 = vmatpush1.xpose.msra.mxu0 0.0
    %757 = vmatprep.subr.mxu0 0.0
    %758 = vmatpush1.xpose.msra.mxu0 0.0
    %759 = vmatprep.subr.mxu0 0.0
    %760 = vmatpush1.xpose.msra.mxu0 0.0
    %761 = vmatprep.subr.mxu0 0.0
    %762 = vmatpush1.xpose.msra.mxu0 0.0
    %763 = vmatprep.subr.mxu0 0.0
    %764 = vmatpush1.xpose.msra.mxu0 0.0
    %765 = vmatprep.subr.mxu0 0.0
    %766 = vmatpush1.xpose.msra.mxu0 0.0
    %767 = vmatprep.subr.mxu0 0.0
    %768 = vmatpush1.xpose.msra.mxu0 0.0
    %769 = vmatprep.subr.mxu0 0.0
    %770 = vmatpush1.xpose.msra.mxu0 0.0
    %771 = vmatprep.subr.mxu0 0.0
    %772 = vmatpush1.xpose.msra.mxu0 0.0
    %773 = vmatprep.subr.mxu0 0.0
    %774 = vmatpush1.xpose.msra.mxu0 0.0
    %775 = vmatprep.subr.mxu0 0.0
    %776 = vmatpush1.xpose.msra.mxu0 0.0
    %777 = vmatprep.subr.mxu0 0.0
    %778 = vmatpush1.xpose.msra.mxu0 0.0
    %779 = vmatprep.subr.mxu0 0.0
    %780 = vmatpush1.xpose.msra.mxu0 0.0
    %781 = vmatprep.subr.mxu0 0.0
    %782 = vmatpush1.xpose.msra.mxu0 0.0
    %783 = vmatprep.subr.mxu0 0.0
    %784 = vmatpush1.xpose.msra.mxu0 0.0
    %785 = vmatprep.subr.mxu0 0.0
    %786 = vmatpush1.xpose.msra.mxu0 0.0
    %787 = vmatprep.subr.mxu0 0.0
    %788 = vmatpush1.xpose.msra.mxu0 0.0
    %789 = vmatprep.subr.mxu0 0.0
    %790 = vmatpush1.xpose.msra.mxu0 0.0
    %791 = vmatprep.subr.mxu0 0.0
    %792 = vmatpush1.xpose.msra.mxu0 0.0
    %793 = vmatprep.subr.mxu0 0.0
    %794 = vmatpush1.xpose.msra.mxu0 0.0
    %795 = vmatprep.subr.mxu0 0.0
    %796 = vmatpush1.xpose.msra.mxu0 0.0
    %797 = vmatprep.subr.mxu0 0.0
    %798 = vmatpush1.xpose.msra.mxu0 0.0
    %799 = vmatprep.subr.mxu0 0.0
    %800 = vmatpush1.xpose.msra.mxu0 0.0
    %801 = vmatprep.subr.mxu0 0.0
    %802 = vmatpush1.xpose.msra.mxu0 0.0
    %803 = vmatprep.subr.mxu0 0.0
    %804 = vmatpush1.xpose.msra.mxu0 0.0
    %805 = vmatprep.subr.mxu0 0.0
    %806 = vmatpush1.xpose.msra.mxu0 0.0
    %807 = vmatprep.mubr.f32.mxu0 0.0
    %808 = vmatmul.mubr.f32.gmra.mrb[0].mxu0 %v729
    %v809 = vpop.f32.mrb[0].mxu0
    %v810 = vadd.f32 %v279, %v809
    %v811 = vpop.f32.mrb[0].mxu0
    %812 = vdwg.mxu0
    %v813 = vtanh.pop %v810
    %v815 = vsel %vm727, %v813, 0
    %817 = vmatprep.subr.mxu0 0.0
    %818 = vmatpush1.xpose.msra.mxu0 %v732
    %819 = vmatprep.subr.mxu0 0.0
    %820 = vmatpush1.xpose.msra.mxu0 %v735
    %821 = vmatprep.subr.mxu0 0.0
    %822 = vmatpush1.xpose.msra.mxu0 %v738
    %823 = vmatprep.subr.mxu0 0.0
    %824 = vmatpush1.xpose.msra.mxu0 %v741
    %825 = vmatprep.subr.mxu0 0.0
    %826 = vmatpush1.xpose.msra.mxu0 0.0
    %827 = vmatprep.subr.mxu0 0.0
    %828 = vmatpush1.xpose.msra.mxu0 0.0
    %829 = vmatprep.subr.mxu0 0.0
    %830 = vmatpush1.xpose.msra.mxu0 0.0
    %831 = vmatprep.subr.mxu0 0.0
    %832 = vmatpush1.xpose.msra.mxu0 0.0
    %833 = vmatprep.subr.mxu0 0.0
    %834 = vmatpush1.xpose.msra.mxu0 0.0
    %835 = vmatprep.subr.mxu0 0.0
    %836 = vmatpush1.xpose.msra.mxu0 0.0
    %837 = vmatprep.subr.mxu0 0.0
    %838 = vmatpush1.xpose.msra.mxu0 0.0
    %839 = vmatprep.subr.mxu0 0.0
    %840 = vmatpush1.xpose.msra.mxu0 0.0
    %841 = vmatprep.subr.mxu0 0.0
    %842 = vmatpush1.xpose.msra.mxu0 0.0
    %843 = vmatprep.subr.mxu0 0.0
    %844 = vmatpush1.xpose.msra.mxu0 0.0
    %845 = vmatprep.subr.mxu0 0.0
    %846 = vmatpush1.xpose.msra.mxu0 0.0
    %847 = vmatprep.subr.mxu0 0.0
    %848 = vmatpush1.xpose.msra.mxu0 0.0
    %849 = vmatprep.subr.mxu0 0.0
    %850 = vmatpush1.xpose.msra.mxu0 0.0
    %851 = vmatprep.subr.mxu0 0.0
    %852 = vmatpush1.xpose.msra.mxu0 0.0
    %853 = vmatprep.subr.mxu0 0.0
    %854 = vmatpush1.xpose.msra.mxu0 0.0
    %855 = vmatprep.subr.mxu0 0.0
    %856 = vmatpush1.xpose.msra.mxu0 0.0
    %857 = vmatprep.subr.mxu0 0.0
    %858 = vmatpush1.xpose.msra.mxu0 0.0
    %859 = vmatprep.subr.mxu0 0.0
    %860 = vmatpush1.xpose.msra.mxu0 0.0
    %861 = vmatprep.subr.mxu0 0.0
    %862 = vmatpush1.xpose.msra.mxu0 0.0
    %863 = vmatprep.subr.mxu0 0.0
    %864 = vmatpush1.xpose.msra.mxu0 0.0
    %865 = vmatprep.subr.mxu0 0.0
    %866 = vmatpush1.xpose.msra.mxu0 0.0
    %867 = vmatprep.subr.mxu0 0.0
    %868 = vmatpush1.xpose.msra.mxu0 0.0
    %869 = vmatprep.subr.mxu0 0.0
    %870 = vmatpush1.xpose.msra.mxu0 0.0
    %871 = vmatprep.subr.mxu0 0.0
    %872 = vmatpush1.xpose.msra.mxu0 0.0
    %873 = vmatprep.subr.mxu0 0.0
    %874 = vmatpush1.xpose.msra.mxu0 0.0
    %875 = vmatprep.subr.mxu0 0.0
    %876 = vmatpush1.xpose.msra.mxu0 0.0
    %877 = vmatprep.subr.mxu0 0.0
    %878 = vmatpush1.xpose.msra.mxu0 0.0
    %879 = vmatprep.subr.mxu0 0.0
    %880 = vmatpush1.xpose.msra.mxu0 0.0
    %881 = vmatprep.mubr.f32.mxu0 0.0
    %882 = vmatmul.mubr.f32.gmra.mrb[0].mxu0 %v815
    %v883 = vpop.f32.mrb[0].mxu0
    %v884 = vadd.f32 %v353, %v883
    %v885 = vpop.f32.mrb[0].mxu0
    %886 = vdwg.mxu0
    %v887 = vtanh.pop %v884
    %v889 = vsel %vm727, %v887, 0
    %891 = vmatprep.subr.mxu0 0.0
    %892 = vmatpush1.xpose.msra.mxu0 %v732
    %893 = vmatprep.subr.mxu0 0.0
    %894 = vmatpush1.xpose.msra.mxu0 %v735
    %895 = vmatprep.subr.mxu0 0.0
    %896 = vmatpush1.xpose.msra.mxu0 %v738
    %897 = vmatprep.subr.mxu0 0.0
    %898 = vmatpush1.xpose.msra.mxu0 %v741
    %899 = vmatprep.subr.mxu0 0.0
    %900 = vmatpush1.xpose.msra.mxu0 0.0
    %901 = vmatprep.subr.mxu0 0.0
    %902 = vmatpush1.xpose.msra.mxu0 0.0
    %903 = vmatprep.subr.mxu0 0.0
    %904 = vmatpush1.xpose.msra.mxu0 0.0
    %905 = vmatprep.subr.mxu0 0.0
    %906 = vmatpush1.xpose.msra.mxu0 0.0
    %907 = vmatprep.subr.mxu0 0.0
    %908 = vmatpush1.xpose.msra.mxu0 0.0
    %909 = vmatprep.subr.mxu0 0.0
    %910 = vmatpush1.xpose.msra.mxu0 0.0
    %911 = vmatprep.subr.mxu0 0.0
    %912 = vmatpush1.xpose.msra.mxu0 0.0
    %913 = vmatprep.subr.mxu0 0.0
    %914 = vmatpush1.xpose.msra.mxu0 0.0
    %915 = vmatprep.subr.mxu0 0.0
    %916 = vmatpush1.xpose.msra.mxu0 0.0
    %917 = vmatprep.subr.mxu0 0.0
    %918 = vmatpush1.xpose.msra.mxu0 0.0
    %919 = vmatprep.subr.mxu0 0.0
    %920 = vmatpush1.xpose.msra.mxu0 0.0
    %921 = vmatprep.subr.mxu0 0.0
    %922 = vmatpush1.xpose.msra.mxu0 0.0
    %923 = vmatprep.subr.mxu0 0.0
    %924 = vmatpush1.xpose.msra.mxu0 0.0
    %925 = vmatprep.subr.mxu0 0.0
    %926 = vmatpush1.xpose.msra.mxu0 0.0
    %927 = vmatprep.subr.mxu0 0.0
    %928 = vmatpush1.xpose.msra.mxu0 0.0
    %929 = vmatprep.subr.mxu0 0.0
    %930 = vmatpush1.xpose.msra.mxu0 0.0
    %931 = vmatprep.subr.mxu0 0.0
    %932 = vmatpush1.xpose.msra.mxu0 0.0
    %933 = vmatprep.subr.mxu0 0.0
    %934 = vmatpush1.xpose.msra.mxu0 0.0
    %935 = vmatprep.subr.mxu0 0.0
    %936 = vmatpush1.xpose.msra.mxu0 0.0
    %937 = vmatprep.subr.mxu0 0.0
    %938 = vmatpush1.xpose.msra.mxu0 0.0
    %939 = vmatprep.subr.mxu0 0.0
    %940 = vmatpush1.xpose.msra.mxu0 0.0
    %941 = vmatprep.subr.mxu0 0.0
    %942 = vmatpush1.xpose.msra.mxu0 0.0
    %943 = vmatprep.subr.mxu0 0.0
    %944 = vmatpush1.xpose.msra.mxu0 0.0
    %945 = vmatprep.subr.mxu0 0.0
    %946 = vmatpush1.xpose.msra.mxu0 0.0
    %947 = vmatprep.subr.mxu0 0.0
    %948 = vmatpush1.xpose.msra.mxu0 0.0
    %949 = vmatprep.subr.mxu0 0.0
    %950 = vmatpush1.xpose.msra.mxu0 0.0
    %951 = vmatprep.subr.mxu0 0.0
    %952 = vmatpush1.xpose.msra.mxu0 0.0
    %953 = vmatprep.subr.mxu0 0.0
    %954 = vmatpush1.xpose.msra.mxu0 0.0
    %955 = vmatprep.mubr.f32.mxu0 0.0
    %956 = vmatmul.mubr.f32.gmra.mrb[0].mxu0 %v889
    %v957 = vpop.f32.mrb[0].mxu0
    %v958 = vadd.f32 %v427, %v957
    %v959 = vpop.f32.mrb[0].mxu0
    %960 = vdwg.mxu0
    %v961 = vtanh.pop %v958
    %v963 = vsel %vm727, %v961, 0
    %965 = vmatprep.subr.mxu0 0.0
    %966 = vmatpush1.xpose.msra.mxu0 %v732
    %967 = vmatprep.subr.mxu0 0.0
    %968 = vmatpush1.xpose.msra.mxu0 %v735
    %969 = vmatprep.subr.mxu0 0.0
    %970 = vmatpush1.xpose.msra.mxu0 %v738
    %971 = vmatprep.subr.mxu0 0.0
    %972 = vmatpush1.xpose.msra.mxu0 %v741
    %973 = vmatprep.subr.mxu0 0.0
    %974 = vmatpush1.xpose.msra.mxu0 0.0
    %975 = vmatprep.subr.mxu0 0.0
    %976 = vmatpush1.xpose.msra.mxu0 0.0
    %977 = vmatprep.subr.mxu0 0.0
    %978 = vmatpush1.xpose.msra.mxu0 0.0
    %979 = vmatprep.subr.mxu0 0.0
    %980 = vmatpush1.xpose.msra.mxu0 0.0
    %981 = vmatprep.subr.mxu0 0.0
    %982 = vmatpush1.xpose.msra.mxu0 0.0
    %983 = vmatprep.subr.mxu0 0.0
    %984 = vmatpush1.xpose.msra.mxu0 0.0
    %985 = vmatprep.subr.mxu0 0.0
    %986 = vmatpush1.xpose.msra.mxu0 0.0
    %987 = vmatprep.subr.mxu0 0.0
    %988 = vmatpush1.xpose.msra.mxu0 0.0
    %989 = vmatprep.subr.mxu0 0.0
    %990 = vmatpush1.xpose.msra.mxu0 0.0
    %991 = vmatprep.subr.mxu0 0.0
    %992 = vmatpush1.xpose.msra.mxu0 0.0
    %993 = vmatprep.subr.mxu0 0.0
    %994 = vmatpush1.xpose.msra.mxu0 0.0
    %995 = vmatprep.subr.mxu0 0.0
    %996 = vmatpush1.xpose.msra.mxu0 0.0
    %997 = vmatprep.subr.mxu0 0.0
    %998 = vmatpush1.xpose.msra.mxu0 0.0
    %999 = vmatprep.subr.mxu0 0.0
    %1000 = vmatpush1.xpose.msra.mxu0 0.0
    %1001 = vmatprep.subr.mxu0 0.0
    %1002 = vmatpush1.xpose.msra.mxu0 0.0
    %1003 = vmatprep.subr.mxu0 0.0
    %1004 = vmatpush1.xpose.msra.mxu0 0.0
    %1005 = vmatprep.subr.mxu0 0.0
    %1006 = vmatpush1.xpose.msra.mxu0 0.0
    %1007 = vmatprep.subr.mxu0 0.0
    %1008 = vmatpush1.xpose.msra.mxu0 0.0
    %1009 = vmatprep.subr.mxu0 0.0
    %1010 = vmatpush1.xpose.msra.mxu0 0.0
    %1011 = vmatprep.subr.mxu0 0.0
    %1012 = vmatpush1.xpose.msra.mxu0 0.0
    %1013 = vmatprep.subr.mxu0 0.0
    %1014 = vmatpush1.xpose.msra.mxu0 0.0
    %1015 = vmatprep.subr.mxu0 0.0
    %1016 = vmatpush1.xpose.msra.mxu0 0.0
    %1017 = vmatprep.subr.mxu0 0.0
    %1018 = vmatpush1.xpose.msra.mxu0 0.0
    %1019 = vmatprep.subr.mxu0 0.0
    %1020 = vmatpush1.xpose.msra.mxu0 0.0
    %1021 = vmatprep.subr.mxu0 0.0
    %1022 = vmatpush1.xpose.msra.mxu0 0.0
    %1023 = vmatprep.subr.mxu0 0.0
    %1024 = vmatpush1.xpose.msra.mxu0 0.0
    %1025 = vmatprep.subr.mxu0 0.0
    %1026 = vmatpush1.xpose.msra.mxu0 0.0
    %1027 = vmatprep.subr.mxu0 0.0
    %1028 = vmatpush1.xpose.msra.mxu0 0.0
    %1029 = vmatprep.mubr.f32.mxu0 0.0
    %1030 = vmatmul.mubr.f32.gmra.mrb[0].mxu0 %v963
    %v1031 = vpop.f32.mrb[0].mxu0
    %v1032 = vadd.f32 %v501, %v1031
    %v1033 = vpop.f32.mrb[0].mxu0
    %1034 = vdwg.mxu0
    %v1035 = vtanh.pop %v1032
    %v1037 = vsel %vm727, %v1035, 0
    %1039 = vmatprep.subr.mxu0 0.0
    %1040 = vmatpush1.xpose.msra.mxu0 %v732
    %1041 = vmatprep.subr.mxu0 0.0
    %1042 = vmatpush1.xpose.msra.mxu0 %v735
    %1043 = vmatprep.subr.mxu0 0.0
    %1044 = vmatpush1.xpose.msra.mxu0 %v738
    %1045 = vmatprep.subr.mxu0 0.0
    %1046 = vmatpush1.xpose.msra.mxu0 %v741
    %1047 = vmatprep.subr.mxu0 0.0
    %1048 = vmatpush1.xpose.msra.mxu0 0.0
    %1049 = vmatprep.subr.mxu0 0.0
    %1050 = vmatpush1.xpose.msra.mxu0 0.0
    %1051 = vmatprep.subr.mxu0 0.0
    %1052 = vmatpush1.xpose.msra.mxu0 0.0
    %1053 = vmatprep.subr.mxu0 0.0
    %1054 = vmatpush1.xpose.msra.mxu0 0.0
    %1055 = vmatprep.subr.mxu0 0.0
    %1056 = vmatpush1.xpose.msra.mxu0 0.0
    %1057 = vmatprep.subr.mxu0 0.0
    %1058 = vmatpush1.xpose.msra.mxu0 0.0
    %1059 = vmatprep.subr.mxu0 0.0
    %1060 = vmatpush1.xpose.msra.mxu0 0.0
    %1061 = vmatprep.subr.mxu0 0.0
    %1062 = vmatpush1.xpose.msra.mxu0 0.0
    %1063 = vmatprep.subr.mxu0 0.0
    %1064 = vmatpush1.xpose.msra.mxu0 0.0
    %1065 = vmatprep.subr.mxu0 0.0
    %1066 = vmatpush1.xpose.msra.mxu0 0.0
    %1067 = vmatprep.subr.mxu0 0.0
    %1068 = vmatpush1.xpose.msra.mxu0 0.0
    %1069 = vmatprep.subr.mxu0 0.0
    %1070 = vmatpush1.xpose.msra.mxu0 0.0
    %1071 = vmatprep.subr.mxu0 0.0
    %1072 = vmatpush1.xpose.msra.mxu0 0.0
    %1073 = vmatprep.subr.mxu0 0.0
    %1074 = vmatpush1.xpose.msra.mxu0 0.0
    %1075 = vmatprep.subr.mxu0 0.0
    %1076 = vmatpush1.xpose.msra.mxu0 0.0
    %1077 = vmatprep.subr.mxu0 0.0
    %1078 = vmatpush1.xpose.msra.mxu0 0.0
    %1079 = vmatprep.subr.mxu0 0.0
    %1080 = vmatpush1.xpose.msra.mxu0 0.0
    %1081 = vmatprep.subr.mxu0 0.0
    %1082 = vmatpush1.xpose.msra.mxu0 0.0
    %1083 = vmatprep.subr.mxu0 0.0
    %1084 = vmatpush1.xpose.msra.mxu0 0.0
    %1085 = vmatprep.subr.mxu0 0.0
    %1086 = vmatpush1.xpose.msra.mxu0 0.0
    %1087 = vmatprep.subr.mxu0 0.0
    %1088 = vmatpush1.xpose.msra.mxu0 0.0
    %1089 = vmatprep.subr.mxu0 0.0
    %1090 = vmatpush1.xpose.msra.mxu0 0.0
    %1091 = vmatprep.subr.mxu0 0.0
    %1092 = vmatpush1.xpose.msra.mxu0 0.0
    %1093 = vmatprep.subr.mxu0 0.0
    %1094 = vmatpush1.xpose.msra.mxu0 0.0
    %1095 = vmatprep.subr.mxu0 0.0
    %1096 = vmatpush1.xpose.msra.mxu0 0.0
    %1097 = vmatprep.subr.mxu0 0.0
    %1098 = vmatpush1.xpose.msra.mxu0 0.0
    %1099 = vmatprep.subr.mxu0 0.0
    %1100 = vmatpush1.xpose.msra.mxu0 0.0
    %1101 = vmatprep.subr.mxu0 0.0
    %1102 = vmatpush1.xpose.msra.mxu0 0.0
    %1103 = vmatprep.mubr.f32.mxu0 0.0
    %1104 = vmatmul.mubr.f32.gmra.mrb[0].mxu0 %v1037
    %v1105 = vpop.f32.mrb[0].mxu0
    %v1106 = vadd.f32 %v575, %v1105
    %v1107 = vpop.f32.mrb[0].mxu0
    %1108 = vdwg.mxu0
    %v1109 = vtanh.pop %v1106
    %v1111 = vsel %vm727, %v1109, 0
    %1113 = vmatprep.subr.mxu0 0.0
    %1114 = vmatpush1.xpose.msra.mxu0 %v732
    %1115 = vmatprep.subr.mxu0 0.0
    %1116 = vmatpush1.xpose.msra.mxu0 %v735
    %1117 = vmatprep.subr.mxu0 0.0
    %1118 = vmatpush1.xpose.msra.mxu0 %v738
    %1119 = vmatprep.subr.mxu0 0.0
    %1120 = vmatpush1.xpose.msra.mxu0 %v741
    %1121 = vmatprep.subr.mxu0 0.0
    %1122 = vmatpush1.xpose.msra.mxu0 0.0
    %1123 = vmatprep.subr.mxu0 0.0
    %1124 = vmatpush1.xpose.msra.mxu0 0.0
    %1125 = vmatprep.subr.mxu0 0.0
    %1126 = vmatpush1.xpose.msra.mxu0 0.0
    %1127 = vmatprep.subr.mxu0 0.0
    %1128 = vmatpush1.xpose.msra.mxu0 0.0
    %1129 = vmatprep.subr.mxu0 0.0
    %1130 = vmatpush1.xpose.msra.mxu0 0.0
    %1131 = vmatprep.subr.mxu0 0.0
    %1132 = vmatpush1.xpose.msra.mxu0 0.0
    %1133 = vmatprep.subr.mxu0 0.0
    %1134 = vmatpush1.xpose.msra.mxu0 0.0
    %1135 = vmatprep.subr.mxu0 0.0
    %1136 = vmatpush1.xpose.msra.mxu0 0.0
    %1137 = vmatprep.subr.mxu0 0.0
    %1138 = vmatpush1.xpose.msra.mxu0 0.0
    %1139 = vmatprep.subr.mxu0 0.0
    %1140 = vmatpush1.xpose.msra.mxu0 0.0
    %1141 = vmatprep.subr.mxu0 0.0
    %1142 = vmatpush1.xpose.msra.mxu0 0.0
    %1143 = vmatprep.subr.mxu0 0.0
    %1144 = vmatpush1.xpose.msra.mxu0 0.0
    %1145 = vmatprep.subr.mxu0 0.0
    %1146 = vmatpush1.xpose.msra.mxu0 0.0
    %1147 = vmatprep.subr.mxu0 0.0
    %1148 = vmatpush1.xpose.msra.mxu0 0.0
    %1149 = vmatprep.subr.mxu0 0.0
    %1150 = vmatpush1.xpose.msra.mxu0 0.0
    %1151 = vmatprep.subr.mxu0 0.0
    %1152 = vmatpush1.xpose.msra.mxu0 0.0
    %1153 = vmatprep.subr.mxu0 0.0
    %1154 = vmatpush1.xpose.msra.mxu0 0.0
    %1155 = vmatprep.subr.mxu0 0.0
    %1156 = vmatpush1.xpose.msra.mxu0 0.0
    %1157 = vmatprep.subr.mxu0 0.0
    %1158 = vmatpush1.xpose.msra.mxu0 0.0
    %1159 = vmatprep.subr.mxu0 0.0
    %1160 = vmatpush1.xpose.msra.mxu0 0.0
    %1161 = vmatprep.subr.mxu0 0.0
    %1162 = vmatpush1.xpose.msra.mxu0 0.0
    %1163 = vmatprep.subr.mxu0 0.0
    %1164 = vmatpush1.xpose.msra.mxu0 0.0
    %1165 = vmatprep.subr.mxu0 0.0
    %1166 = vmatpush1.xpose.msra.mxu0 0.0
    %1167 = vmatprep.subr.mxu0 0.0
    %1168 = vmatpush1.xpose.msra.mxu0 0.0
    %1169 = vmatprep.subr.mxu0 0.0
    %1170 = vmatpush1.xpose.msra.mxu0 0.0
    %1171 = vmatprep.subr.mxu0 0.0
    %1172 = vmatpush1.xpose.msra.mxu0 0.0
    %1173 = vmatprep.subr.mxu0 0.0
    %1174 = vmatpush1.xpose.msra.mxu0 0.0
    %1175 = vmatprep.subr.mxu0 0.0
    %1176 = vmatpush1.xpose.msra.mxu0 0.0
    %1177 = vmatprep.mubr.f32.mxu0 0.0
    %1178 = vmatmul.mubr.f32.gmra.mrb[0].mxu0 %v1111
    %v1179 = vpop.f32.mrb[0].mxu0
    %v1180 = vadd.f32 %v649, %v1179
    %v1181 = vpop.f32.mrb[0].mxu0
    %1182 = vdwg.mxu0
    %v1183 = vtanh.pop %v1180
    %v1185 = vsel %vm727, %v1183, 0
    %1187 = vmatprep.subr.mxu0 0.0
    %1188 = vmatpush1.xpose.msra.mxu0 %v732
    %1189 = vmatprep.subr.mxu0 0.0
    %1190 = vmatpush1.xpose.msra.mxu0 %v735
    %1191 = vmatprep.subr.mxu0 0.0
    %1192 = vmatpush1.xpose.msra.mxu0 %v738
    %1193 = vmatprep.subr.mxu0 0.0
    %1194 = vmatpush1.xpose.msra.mxu0 %v741
    %1195 = vmatprep.subr.mxu0 0.0
    %1196 = vmatpush1.xpose.msra.mxu0 0.0
    %1197 = vmatprep.subr.mxu0 0.0
    %1198 = vmatpush1.xpose.msra.mxu0 0.0
    %1199 = vmatprep.subr.mxu0 0.0
    %1200 = vmatpush1.xpose.msra.mxu0 0.0
    %1201 = vmatprep.subr.mxu0 0.0
    %1202 = vmatpush1.xpose.msra.mxu0 0.0
    %1203 = vmatprep.subr.mxu0 0.0
    %1204 = vmatpush1.xpose.msra.mxu0 0.0
    %1205 = vmatprep.subr.mxu0 0.0
    %1206 = vmatpush1.xpose.msra.mxu0 0.0
    %1207 = vmatprep.subr.mxu0 0.0
    %1208 = vmatpush1.xpose.msra.mxu0 0.0
    %1209 = vmatprep.subr.mxu0 0.0
    %1210 = vmatpush1.xpose.msra.mxu0 0.0
    %1211 = vmatprep.subr.mxu0 0.0
    %1212 = vmatpush1.xpose.msra.mxu0 0.0
    %1213 = vmatprep.subr.mxu0 0.0
    %1214 = vmatpush1.xpose.msra.mxu0 0.0
    %1215 = vmatprep.subr.mxu0 0.0
    %1216 = vmatpush1.xpose.msra.mxu0 0.0
    %1217 = vmatprep.subr.mxu0 0.0
    %1218 = vmatpush1.xpose.msra.mxu0 0.0
    %1219 = vmatprep.subr.mxu0 0.0
    %1220 = vmatpush1.xpose.msra.mxu0 0.0
    %1221 = vmatprep.subr.mxu0 0.0
    %1222 = vmatpush1.xpose.msra.mxu0 0.0
    %1223 = vmatprep.subr.mxu0 0.0
    %1224 = vmatpush1.xpose.msra.mxu0 0.0
    %1225 = vmatprep.subr.mxu0 0.0
    %1226 = vmatpush1.xpose.msra.mxu0 0.0
    %1227 = vmatprep.subr.mxu0 0.0
    %1228 = vmatpush1.xpose.msra.mxu0 0.0
    %1229 = vmatprep.subr.mxu0 0.0
    %1230 = vmatpush1.xpose.msra.mxu0 0.0
    %1231 = vmatprep.subr.mxu0 0.0
    %1232 = vmatpush1.xpose.msra.mxu0 0.0
    %1233 = vmatprep.subr.mxu0 0.0
    %1234 = vmatpush1.xpose.msra.mxu0 0.0
    %1235 = vmatprep.subr.mxu0 0.0
    %1236 = vmatpush1.xpose.msra.mxu0 0.0
    %1237 = vmatprep.subr.mxu0 0.0
    %1238 = vmatpush1.xpose.msra.mxu0 0.0
    %1239 = vmatprep.subr.mxu0 0.0
    %1240 = vmatpush1.xpose.msra.mxu0 0.0
    %1241 = vmatprep.subr.mxu0 0.0
    %1242 = vmatpush1.xpose.msra.mxu0 0.0
    %1243 = vmatprep.subr.mxu0 0.0
    %1244 = vmatpush1.xpose.msra.mxu0 0.0
    %1245 = vmatprep.subr.mxu0 0.0
    %1246 = vmatpush1.xpose.msra.mxu0 0.0
    %1247 = vmatprep.subr.mxu0 0.0
    %1248 = vmatpush1.xpose.msra.mxu0 0.0
    %1249 = vmatprep.subr.mxu0 0.0
    %1250 = vmatpush1.xpose.msra.mxu0 0.0
    %1251 = vmatprep.mubr.f32.mxu0 0.0
    %1252 = vmatmul.mubr.f32.gmra.mrb[0].mxu0 %v1185
    %v1253 = vpop.f32.mrb[0].mxu0
    %v1254 = vadd.f32 %v723, %v1253
    %v1255 = vpop.f32.mrb[0].mxu0
    %1256 = vdwg.mxu0
    %v1257 = vtanh.pop %v1254
    %v1258 = vld [vmem:[%s3] sm:$0xff]
    %v1259 = vld [vmem:[%s3 + $0x8] sm:$0xff]
    %v1260 = vld [vmem:[%s3 + $0x10] sm:$0xff]
    %v1261 = vld [vmem:[%s3 + $0x18] sm:$0xff]
    %v1262 = vld [vmem:[%s5] sm:$0x1]
    %v1264 = vlaneseq
    %v1265 = vshrl.u32 %v1264, 7
    %v1266 = vsub.s32 0, %v1265
    %v1267 = vrot.slane %v1262, %v1266
    %v1270 = vsel %vm727, %v1257, 0
    %1272 = vmatprep.subr.mxu0 0.0
    %1273 = vmatpush1.msra.mxu0 %v1258
    %1274 = vmatprep.subr.mxu0 0.0
    %1275 = vmatpush1.msra.mxu0 %v1259
    %1276 = vmatprep.subr.mxu0 0.0
    %1277 = vmatpush1.msra.mxu0 %v1260
    %1278 = vmatprep.subr.mxu0 0.0
    %1279 = vmatpush1.msra.mxu0 %v1261
    %1280 = vmatprep.subr.mxu0 0.0
    %1281 = vmatpush1.msra.mxu0 0.0
    %1282 = vmatprep.subr.mxu0 0.0
    %1283 = vmatpush1.msra.mxu0 0.0
    %1284 = vmatprep.subr.mxu0 0.0
    %1285 = vmatpush1.msra.mxu0 0.0
    %1286 = vmatprep.subr.mxu0 0.0
    %1287 = vmatpush1.msra.mxu0 0.0
    %1288 = vmatprep.subr.mxu0 0.0
    %1289 = vmatpush1.msra.mxu0 0.0
    %1290 = vmatprep.subr.mxu0 0.0
    %1291 = vmatpush1.msra.mxu0 0.0
    %1292 = vmatprep.subr.mxu0 0.0
    %1293 = vmatpush1.msra.mxu0 0.0
    %1294 = vmatprep.subr.mxu0 0.0
    %1295 = vmatpush1.msra.mxu0 0.0
    %1296 = vmatprep.subr.mxu0 0.0
    %1297 = vmatpush1.msra.mxu0 0.0
    %1298 = vmatprep.subr.mxu0 0.0
    %1299 = vmatpush1.msra.mxu0 0.0
    %1300 = vmatprep.subr.mxu0 0.0
    %1301 = vmatpush1.msra.mxu0 0.0
    %1302 = vmatprep.subr.mxu0 0.0
    %1303 = vmatpush1.msra.mxu0 0.0
    %1304 = vmatprep.subr.mxu0 0.0
    %1305 = vmatpush1.msra.mxu0 0.0
    %1306 = vmatprep.subr.mxu0 0.0
    %1307 = vmatpush1.msra.mxu0 0.0
    %1308 = vmatprep.subr.mxu0 0.0
    %1309 = vmatpush1.msra.mxu0 0.0
    %1310 = vmatprep.subr.mxu0 0.0
    %1311 = vmatpush1.msra.mxu0 0.0
    %1312 = vmatprep.subr.mxu0 0.0
    %1313 = vmatpush1.msra.mxu0 0.0
    %1314 = vmatprep.subr.mxu0 0.0
    %1315 = vmatpush1.msra.mxu0 0.0
    %1316 = vmatprep.subr.mxu0 0.0
    %1317 = vmatpush1.msra.mxu0 0.0
    %1318 = vmatprep.subr.mxu0 0.0
    %1319 = vmatpush1.msra.mxu0 0.0
    %1320 = vmatprep.subr.mxu0 0.0
    %1321 = vmatpush1.msra.mxu0 0.0
    %1322 = vmatprep.subr.mxu0 0.0
    %1323 = vmatpush1.msra.mxu0 0.0
    %1324 = vmatprep.subr.mxu0 0.0
    %1325 = vmatpush1.msra.mxu0 0.0
    %1326 = vmatprep.subr.mxu0 0.0
    %1327 = vmatpush1.msra.mxu0 0.0
    %1328 = vmatprep.subr.mxu0 0.0
    %1329 = vmatpush1.msra.mxu0 0.0
    %1330 = vmatprep.subr.mxu0 0.0
    %1331 = vmatpush1.msra.mxu0 0.0
    %1332 = vmatprep.subr.mxu0 0.0
    %1333 = vmatpush1.msra.mxu0 0.0
    %1334 = vmatprep.subr.mxu0 0.0
    %1335 = vmatpush1.msra.mxu0 0.0
    %1336 = vmatprep.mubr.f32.mxu0 0.0
    %1337 = vmatmul.mubr.f32.gmra.mrb[0].mxu0 %v1270
    %v1338 = vpop.f32.mrb[0].mxu0
    %v1339 = vadd.f32 %v1267, %v1338
    %v1340 = vpop.f32.mrb[0].mxu0
    %1341 = vdwg.mxu0
    %vm1342 = vcmask 80896
    %1343 = vst.msk [vmem:[#allocation2] sm:$0xff] %vm1342, %v1339
    // Predicated region
    $region26: #{tpu_custom_call.1} parent=1 // pred_check
      _
    $region27: #{tpu_custom_call.1} parent=1 // pred_check_branch
      %1345 = sbr.rel (0) target = $region29
    $region28: #{tpu_custom_call.1} parent=1 // pred_region
      %s1347 = ssub.s32 128, 128
      %1348 = vsyncadd [#allocation3], %s1347
      %s1350 = sshll.u32 [#allocation2], 4
      %s1351 = int_to_ptr.vmem [resolvable:$true] %s1350
      %1353 = dma.vmem_to_hbm [thread:$0]  %s1351, 128, %s6, [#allocation3]
    $region29: #{tpu_custom_call.1} parent=1 // pred_fallthru
      _
    // Predicated region
    $region30: #{tpu_custom_call.1} parent=1 // pred_check
      _
    $region31: #{tpu_custom_call.1} parent=1 // pred_check_branch
      %1355 = sbr.rel (0) target = $region33
    $region32: #{tpu_custom_call.1} parent=1 // pred_region
      %1356 = dma.done [#allocation3], 128
    $region33: #{tpu_custom_call.1} parent=1 // pred_fallthru
      _
    %1357 = vsyncpa [#allocation3], 1

</llo_original>
